<compile_context>
chip_gen: v5e
topology: v5e:2x2
jax: 0.10.0
libtpu: 0.0.40
codegen_flags: <defaults>
</compile_context>

<pallas_src>
import functools

import jax
import jax.numpy as jnp
from jax.experimental import pallas as pl
from jax.experimental.pallas import tpu as pltpu


def _depth_attn_kernel(x_ref, t_ref, b_ref, o_ref, *, c_scale):
    # x_ref: (D, chans, W)   one sample (batch dim squeezed)
    # t_ref: (D, D)          banded Toeplitz matrix of the (k,1) conv weights
    # b_ref: (1,)            conv bias scalar (SMEM)
    # o_ref: (D, chans, W)
    x = x_ref[...].astype(jnp.float32)                 # (D, chans, W)
    t = t_ref[...].astype(jnp.float32)                 # (D, D)
    bias = b_ref[0]

    # AdaptiveAvgPool2d((1, W)) == mean over the chans axis.
    pool = jnp.mean(x, axis=1)                         # (D, W)

    # Conv2d(1, 1, (k, 1), padding=(k//2, 0)) along D as one MXU matmul.
    y = jnp.dot(t, pool, preferred_element_type=jnp.float32) + bias   # (D, W)

    # Softmax over the depth dim (dim=-2 of (B, 1, D, W) == axis 0 here).
    y = y - jnp.max(y, axis=0, keepdims=True)
    e = jnp.exp(y)
    attn = e / jnp.sum(e, axis=0, keepdims=True)       # (D, W)

    # out = attn * C * x, broadcasting over chans; W stays the lane dim.
    out = (attn * c_scale)[:, None, :] * x             # (D, chans, W)
    o_ref[...] = out.astype(o_ref.dtype)


def eeg_depth_attention(x, conv_weight, conv_bias, C):
    """x: (B, D, chans, W); conv_weight: (k,) (== torch weight (1,1,k,1) squeezed);
    conv_bias: scalar; C: python scalar (== channel_depth1 in the module).

    Returns (B, D, chans, W), same semantics as EEGDepthAttention.forward.
    """
    B, D, chans, W = x.shape
    k = conv_weight.shape[0]
    pad = k // 2

    # Banded Toeplitz: T[d, d'] = w[d' - d + pad] if 0 <= d'-d+pad < k else 0,
    # so (T @ pool)[d] = sum_j w[j] * pool[d - pad + j]  (zero-padded cross-correlation).
    d_idx = jnp.arange(D)
    j = d_idx[None, :] - d_idx[:, None] + pad                      # (D, D)
    valid = (j >= 0) & (j < k)
    T = jnp.where(valid, conv_weight[jnp.clip(j, 0, k - 1)], 0.0).astype(jnp.float32)

    bias_arr = jnp.reshape(conv_bias, (1,)).astype(jnp.float32)

    kernel = functools.partial(_depth_attn_kernel, c_scale=float(C))

    itemsize = jnp.dtype(x.dtype).itemsize
    cost = pl.CostEstimate(
        flops=2 * B * D * D * W + 3 * B * D * chans * W,
        transcendentals=B * D * W,
        bytes_accessed=2 * B * D * chans * W * itemsize + D * D * 4 + 4,
    )

    grid_spec = pltpu.PrefetchScalarGridSpec(
        num_scalar_prefetch=0,
        grid=(B,),
        in_specs=[
            pl.BlockSpec((pl.Squeezed(), D, chans, W), lambda b: (b, 0, 0, 0)),  # x
            pl.BlockSpec((D, D), lambda b: (0, 0)),                              # Toeplitz (shared)
            pl.BlockSpec(memory_space=pltpu.MemorySpace.SMEM),                   # bias scalar
        ],
        out_specs=pl.BlockSpec((pl.Squeezed(), D, chans, W), lambda b: (b, 0, 0, 0)),
    )

    return pl.pallas_call(
        kernel,
        out_shape=jax.ShapeDtypeStruct((B, D, chans, W), x.dtype),
        grid_spec=grid_spec,
        compiler_params=pltpu.CompilerParams(dimension_semantics=("parallel",)),
        cost_estimate=cost,
    )(x, T, bias_arr)


def _reference(x, conv_weight, conv_bias, C):
    # Pure-JAX mirror of the PyTorch forward.
    B, D, chans, W = x.shape
    k = conv_weight.shape[0]
    pad = k // 2
    pool = jnp.mean(x, axis=2)                                     # (B, D, W)
    pool_pad = jnp.pad(pool, ((0, 0), (pad, pad), (0, 0)))         # zero padding along D
    y = sum(conv_weight[j] * pool_pad[:, j:j + D, :] for j in range(k)) + conv_bias
    y = y - jnp.max(y, axis=1, keepdims=True)
    e = jnp.exp(y)
    attn = e / jnp.sum(e, axis=1, keepdims=True)                   # softmax over D
    return (attn * C)[:, :, None, :] * x                           # (B, D, chans, W)


if __name__ == "__main__":
    # Small shapes consistent with the module: x = (B, channel_depth1, chans, W).
    B, D, chans, W, k = 2, 16, 8, 128, 7
    C = D  # in LMDA-Net, self.C == channel_depth1 (x.shape[1])

    key = jax.random.PRNGKey(0)
    kx, kw, kb = jax.random.split(key, 3)

    x = jax.random.normal(kx, (B, D, chans, W), dtype=jnp.float32)
    conv_weight = 0.3 * jax.random.normal(kw, (k,), dtype=jnp.float32)  # torch weight (1,1,k,1)
    conv_bias = 0.1 * jax.random.normal(kb, (), dtype=jnp.float32)

    out = eeg_depth_attention(x, conv_weight, conv_bias, C)
    out = jax.block_until_ready(out)

    ref = _reference(x, conv_weight, conv_bias, C)
    assert out.shape == (B, D, chans, W), out.shape
    assert jnp.allclose(out, ref, atol=1e-4, rtol=1e-4), "mismatch vs reference"

    print("KERNEL_OK")
</pallas_src>

<mosaic_0001>
module attributes {stable_mosaic.version = 11 : i64} {
  func.func @_depth_attn_kernel(%arg0: i32, %arg1: memref<1x16x8x128xf32, #tpu.memory_space<vmem>>, %arg2: memref<16x16xf32, #tpu.memory_space<vmem>>, %arg3: memref<1xf32, #tpu.memory_space<smem>>, %arg4: memref<1x16x8x128xf32, #tpu.memory_space<vmem>>) attributes {dimension_semantics = [#tpu.dimension_semantics<parallel>], iteration_bounds = array<i64: 2>, scalar_prefetch = 0 : i64, scratch_operands = 0 : i64, tpu.core_type = #tpu.core_type<tc>, window_params = [{transform_indices = @transform_0, window_bounds = array<i64: 1, 16, 8, 128>}, {pipeline_mode = #tpu.pipeline_mode<synchronous>, transform_indices = @transform_1, window_bounds = array<i64: 16, 16>}, {transform_indices = @transform_2, window_bounds = array<i64: 1>}, {transform_indices = @transform_3, window_bounds = array<i64: 1, 16, 8, 128>}]} {
    %c0 = arith.constant 0 : index
    %c0_0 = arith.constant 0 : index
    %c0_1 = arith.constant 0 : index
    %c0_2 = arith.constant 0 : index
    %0 = vector.load %arg1[%c0, %c0_0, %c0_1, %c0_2] : memref<1x16x8x128xf32, #tpu.memory_space<vmem>>, vector<1x16x8x128xf32>
    %1 = vector.shape_cast %0 : vector<1x16x8x128xf32> to vector<16x8x128xf32>
    %c0_3 = arith.constant 0 : index
    %c0_4 = arith.constant 0 : index
    %2 = vector.load %arg2[%c0_3, %c0_4] : memref<16x16xf32, #tpu.memory_space<vmem>>, vector<16x16xf32>
    %c0_5 = arith.constant 0 : index
    %3 = memref.load %arg3[%c0_5] : memref<1xf32, #tpu.memory_space<smem>>
    %cst = arith.constant dense<0.000000e+00> : vector<16x128xf32>
    %4 = vector.multi_reduction <add>, %1, %cst [1] : vector<16x8x128xf32> to vector<16x128xf32>
    %cst_6 = arith.constant 8.000000e+00 : f32
    %5 = vector.broadcast %cst_6 : f32 to vector<16x128xf32>
    %6 = arith.divf %4, %5 : vector<16x128xf32>
    %cst_7 = arith.constant dense<0.000000e+00> : vector<16x128xf32>
    %7 = tpu.matmul %2, %6, %cst_7 {dimension_numbers = #tpu.dot_dimension_numbers<[1], [0], [0], [1], [0, 0, 1, 1], [], []>} : vector<16x16xf32>, vector<16x128xf32>, vector<16x128xf32> -> vector<16x128xf32>
    %8 = vector.broadcast %3 : f32 to vector<16x128xf32>
    %9 = arith.addf %7, %8 : vector<16x128xf32>
    %cst_8 = arith.constant dense<0xFF800000> : vector<128xf32>
    %10 = vector.multi_reduction <maximumf>, %9, %cst_8 [0] : vector<16x128xf32> to vector<128xf32>
    %11 = vector.shape_cast %10 : vector<128xf32> to vector<1x128xf32>
    %12 = vector.broadcast %11 : vector<1x128xf32> to vector<16x128xf32>
    %13 = arith.subf %9, %12 : vector<16x128xf32>
    %14 = math.exp %13 : vector<16x128xf32>
    %cst_9 = arith.constant dense<0.000000e+00> : vector<128xf32>
    %15 = vector.multi_reduction <add>, %14, %cst_9 [0] : vector<16x128xf32> to vector<128xf32>
    %16 = vector.shape_cast %15 : vector<128xf32> to vector<1x128xf32>
    %17 = vector.broadcast %16 : vector<1x128xf32> to vector<16x128xf32>
    %18 = arith.divf %14, %17 : vector<16x128xf32>
    %cst_10 = arith.constant 1.600000e+01 : f32
    %19 = vector.broadcast %cst_10 : f32 to vector<16x128xf32>
    %20 = arith.mulf %18, %19 : vector<16x128xf32>
    %21 = vector.shape_cast %20 : vector<16x128xf32> to vector<16x1x128xf32>
    %22 = vector.broadcast %21 : vector<16x1x128xf32> to vector<16x8x128xf32>
    %23 = arith.mulf %22, %1 : vector<16x8x128xf32>
    %c0_11 = arith.constant 0 : index
    %c0_12 = arith.constant 0 : index
    %c0_13 = arith.constant 0 : index
    %c0_14 = arith.constant 0 : index
    %24 = vector.load %arg4[%c0_11, %c0_12, %c0_13, %c0_14] : memref<1x16x8x128xf32, #tpu.memory_space<vmem>>, vector<1x16x8x128xf32>
    %25 = vector.shape_cast %24 : vector<1x16x8x128xf32> to vector<16x8x128xf32>
    %26 = vector.shape_cast %23 : vector<16x8x128xf32> to vector<1x16x8x128xf32>
    tpu.vector_store %arg4[%c0_11, %c0_12, %c0_13, %c0_14], %26 {strides = array<i32>} : memref<1x16x8x128xf32, #tpu.memory_space<vmem>>, vector<1x16x8x128xf32>,
    return
  }
  func.func @transform_0(%arg0: i32) -> (i32, i32, i32, i32) {
    %c0_i32 = arith.constant 0 : i32
    %c0_i32_0 = arith.constant 0 : i32
    %c0_i32_1 = arith.constant 0 : i32
    %c0_i32_2 = arith.constant 0 : i32
    return %arg0, %c0_i32, %c0_i32_0, %c0_i32_1 : i32, i32, i32, i32
  }
  func.func @transform_1(%arg0: i32) -> (i32, i32) {
    %c0_i32 = arith.constant 0 : i32
    %c0_i32_0 = arith.constant 0 : i32
    %c0_i32_1 = arith.constant 0 : i32
    return %c0_i32, %c0_i32_0 : i32, i32
  }
  func.func @transform_2(%arg0: i32) -> i32 {
    %c0_i32 = arith.constant 0 : i32
    %c0_i32_0 = arith.constant 0 : i32
    return %c0_i32 : i32
  }
  func.func @transform_3(%arg0: i32) -> (i32, i32, i32, i32) {
    %c0_i32 = arith.constant 0 : i32
    %c0_i32_0 = arith.constant 0 : i32
    %c0_i32_1 = arith.constant 0 : i32
    %c0_i32_2 = arith.constant 0 : i32
    return %arg0, %c0_i32, %c0_i32_0, %c0_i32_1 : i32, i32, i32, i32
  }
}

</mosaic_0001>

<llo_original>
// kernel: tpu_custom_call.1
$region0: #{tpu_custom_call.1}
  #allocation0 [shape = 'u32[]', space=smem, size = 0x4, offset = 0x4, fixed_abs, tag = 'smem constant byte address 0x4 - core index']
  #allocation1 [shape = 'u32[72,128]{1,0:T(1,128)}', space=vmem, size = 0x9000, scoped, tag = 'internal scratch']
  #allocation2 [shape = 'f32[1]{0:T(128)S(6)}', space=smem, size = 0x200, scoped, tag = 'scoped memory for tpu_custom_call.1']
  %s0 = inlined_call_operand.hbm [shape: f32[2,16,8,128], index: 0, kind: input, shape index: {}]
  %s1 = inlined_call_operand.hbm [shape: f32[16,16], index: 1, kind: input, shape index: {}]
  %s2 = inlined_call_operand.<no memory space> [shape: f32[1], index: 2, kind: input, shape index: {}]
  %s3 = inlined_call_operand.hbm [shape: f32[2,16,8,128], index: 3, kind: output, shape index: {}]
  %s4 = sld [smem:[#allocation0]]
  $region53: #{tpu_custom_call.1} parent=0
    _
  %s6 = ssub.s32 1, %s4
  %s7 = scalar_select 0, %s6, %s4
  %8 = sst [smem:[#allocation2]] %s2
  $region1: #{tpu_custom_call.1} parent=0
    #allocation3 [shape = 'u8[131072]{0}', space=vmem, size = 0x20000, scoped, tag = 'input window, operand 0']
    #allocation4 [shape = 's32[2]{0}', space=sflag, size = 0x8, scoped, tag = 'scoped memory for tpu_custom_call.1']
    #allocation5 [shape = 's32[2]{0}', space=sflag, size = 0x8, scoped, tag = 'scoped memory for tpu_custom_call.1']
    #allocation6 [shape = 'u8[8192]{0}', space=vmem, size = 0x2000, scoped, tag = 'input window, operand 1, single buffered']
    #allocation7 [shape = 's32[1]{0}', space=sflag, size = 0x4, scoped, tag = 'scoped memory for tpu_custom_call.1']
    #allocation8 [shape = 'u8[131072]{0}', space=vmem, size = 0x20000, scoped, tag = 'output window, operand 0']
    %9 = vsyncpa [#allocation4], 0
    %s10 = scalar_lea.sflag [#allocation4], 1
    %11 = vsyncpa %s10, 0
    %12 = vsyncpa [#allocation7], 0
    %13 = vsyncpa [#allocation5], 0
    %s14 = scalar_lea.sflag [#allocation5], 1
    %15 = vsyncpa %s14, 0
    loop: start=0, step=1, limit=4
    $region2: #{tpu_custom_call.1} parent=1 // loop_pre_header
      _
    $region3: #{tpu_custom_call.1} parent=1 // loop_header
      %s17 = sphi 0, %s21
      %p18 = scmp.ge.s32.totalorder %s17, 4
      %s27 = sphi 0, %s29
      %s30 = sphi 0, %s27
      %s31 = sphi 0, %s30
      %s47 = sphi 0, %s31
      %s51 = sphi 0, %s51
      %s53 = sphi 0, %s51
      %s54 = sphi 0, %s53
      %s68 = sphi 0, %s54
      %s72 = sphi 0, %s72
      %s74 = sphi 0, %s72
      %s75 = sphi 0, %s74
      %s89 = sphi 0, %s75
      %s95 = sphi 0, %s97
      %s98 = sphi 0, %s95
      %s99 = sphi 0, %s98
      %s115 = sphi 0, %s99
    $region4: #{tpu_custom_call.1} parent=1 // loop_header_branch
      %20 = sbr.rel (%p18) target = $region8
    $region5: #{tpu_custom_call.1} parent=1 // loop_body
      %s22 = ssub.s32 %s17, 1
      %s23 = ssub.s32 %s17, 2
      %s24 = sadd.s32 %s17, 1
      %s25 = ssub.s32 %s17, %s24
      %p26 = scmp.eq.s32.totalorder %s25, 0
      %s28 = sadd.s32 %s27, 1
      %s29 = scalar_select %p26, %s27, %s28
      %p32 = pneg %p26
      %p33 = scmp.eq.s32.totalorder %s17, 1
      %p34 = por %p32, %p33
      %p35 = scmp.ne.s32.totalorder %s27, %s30
      %p36 = scmp.eq.s32.totalorder %s17, 0
      %p37 = por %p35, %p36
      %p38 = scmp.ne.s32.totalorder %s27, %s30
      %p39 = scmp.eq.s32.totalorder %s22, 1
      %p40 = por %p38, %p39
      %p41 = scmp.ne.s32.totalorder %s30, %s31
      %p42 = scmp.eq.s32.totalorder %s22, 0
      %p43 = por %p41, %p42
      %p44 = scmp.ne.s32.totalorder %s30, %s31
      %p45 = scmp.eq.s32.totalorder %s23, 1
      %p46 = por %p44, %p45
      %p48 = scmp.ne.s32.totalorder %s31, %s47
      %p49 = scmp.eq.s32.totalorder %s23, 0
      %p50 = por %p48, %p49
      %s52 = sadd.s32 %s51, 1
      %p55 = scmp.eq.s32.totalorder %s17, 1
      %p56 = scmp.ne.s32.totalorder %s51, %s53
      %p57 = scmp.eq.s32.totalorder %s17, 0
      %p58 = por %p56, %p57
      %p59 = scmp.ne.s32.totalorder %s51, %s53
      %p60 = scmp.eq.s32.totalorder %s22, 1
      %p61 = por %p59, %p60
      %p62 = scmp.ne.s32.totalorder %s53, %s54
      %p63 = scmp.eq.s32.totalorder %s22, 0
      %p64 = por %p62, %p63
      %p65 = scmp.ne.s32.totalorder %s53, %s54
      %p66 = scmp.eq.s32.totalorder %s23, 1
      %p67 = por %p65, %p66
      %p69 = scmp.ne.s32.totalorder %s54, %s68
      %p70 = scmp.eq.s32.totalorder %s23, 0
      %p71 = por %p69, %p70
      %s73 = sadd.s32 %s72, 1
      %p76 = scmp.eq.s32.totalorder %s17, 1
      %p77 = scmp.ne.s32.totalorder %s72, %s74
      %p78 = scmp.eq.s32.totalorder %s17, 0
      %p79 = por %p77, %p78
      %p80 = scmp.ne.s32.totalorder %s72, %s74
      %p81 = scmp.eq.s32.totalorder %s22, 1
      %p82 = por %p80, %p81
      %p83 = scmp.ne.s32.totalorder %s74, %s75
      %p84 = scmp.eq.s32.totalorder %s22, 0
      %p85 = por %p83, %p84
      %p86 = scmp.ne.s32.totalorder %s74, %s75
      %p87 = scmp.eq.s32.totalorder %s23, 1
      %p88 = por %p86, %p87
      %p90 = scmp.ne.s32.totalorder %s75, %s89
      %p91 = scmp.eq.s32.totalorder %s23, 0
      %p92 = por %p90, %p91
      %s93 = ssub.s32 %s17, %s24
      %p94 = scmp.eq.s32.totalorder %s93, 0
      %s96 = sadd.s32 %s95, 1
      %s97 = scalar_select %p94, %s95, %s96
      %p100 = pneg %p94
      %p101 = scmp.eq.s32.totalorder %s17, 1
      %p102 = por %p100, %p101
      %p103 = scmp.ne.s32.totalorder %s95, %s98
      %p104 = scmp.eq.s32.totalorder %s17, 0
      %p105 = por %p103, %p104
      %p106 = scmp.ne.s32.totalorder %s95, %s98
      %p107 = scmp.eq.s32.totalorder %s22, 1
      %p108 = por %p106, %p107
      %p109 = scmp.ne.s32.totalorder %s98, %s99
      %p110 = scmp.eq.s32.totalorder %s22, 0
      %p111 = por %p109, %p110
      %p112 = scmp.ne.s32.totalorder %s98, %s99
      %p113 = scmp.eq.s32.totalorder %s23, 1
      %p114 = por %p112, %p113
      %p116 = scmp.ne.s32.totalorder %s99, %s115
      %p117 = scmp.eq.s32.totalorder %s23, 0
      %p118 = por %p116, %p117
      %p119 = scmp.le.s32.totalorder 1, %s17
      %p120 = scmp.lt.s32.totalorder %s17, 3
      %p121 = pnand %p119, %p120
      %p122 = pneg %p121
      // Predicated region
      $region9: #{tpu_custom_call.1} parent=5 // pred_check
        _
      $region10: #{tpu_custom_call.1} parent=5 // pred_check_branch
        %124 = sbr.rel (%p121) target = $region12
      $region11: #{tpu_custom_call.1} parent=5 // pred_region
        %s125 = ssub.s32 %s17, 1
        // Predicated region
        $region13: #{tpu_custom_call.1} parent=11 // pred_check
          %p126 = pneg %p64
        $region14: #{tpu_custom_call.1} parent=11 // pred_check_branch
          %128 = sbr.rel (%p126) target = $region16
        $region15: #{tpu_custom_call.1} parent=11 // pred_region
          %130 = vsyncadd [#allocation7], 0
          %s131 = sshll.u32 %s1, 4
          %s132 = int_to_ptr.hbm [resolvable:$true] %s131
          %s133 = sshll.u32 [#allocation6], 4
          %s134 = int_to_ptr.vmem [resolvable:$true] %s133
          %139 = dma.hbm_to_vmem [thread:$0]  %s132, 256, %s134, [#allocation7], 128, 128, 8
        $region16: #{tpu_custom_call.1} parent=11 // pred_fallthru
          _
        // Predicated region
        $region17: #{tpu_custom_call.1} parent=11 // pred_check
          %p140 = pneg %p85
        $region18: #{tpu_custom_call.1} parent=11 // pred_check_branch
          %142 = sbr.rel (%p140) target = $region20
        $region19: #{tpu_custom_call.1} parent=11 // pred_region
          _
        $region20: #{tpu_custom_call.1} parent=11 // pred_fallthru
          _
      $region12: #{tpu_custom_call.1} parent=5 // pred_fallthru
        _
      %p143 = scmp.lt.s32.totalorder %s17, 2
      // Predicated region
      $region21: #{tpu_custom_call.1} parent=5 // pred_check
        %p144 = pneg %p143
      $region22: #{tpu_custom_call.1} parent=5 // pred_check_branch
        %146 = sbr.rel (%p144) target = $region24
      $region23: #{tpu_custom_call.1} parent=5 // pred_region
        // Predicated region
        $region25: #{tpu_custom_call.1} parent=23 // pred_check
          %p147 = pneg %p37
        $region26: #{tpu_custom_call.1} parent=23 // pred_check_branch
          %149 = sbr.rel (%p147) target = $region28
        $region27: #{tpu_custom_call.1} parent=23 // pred_region
          %s150 = sand.u32 %s27, 1
          %s151 = scalar_lea.sflag [#allocation4], %s150
          %s152 = sand.u32 %s27, 1
          %s153 = smul.addr %s152, 128
          %s154 = scalar_lea.vmem [#allocation3], %s153
          %156 = vsyncadd %s151, 0
          %s157 = smul.addr %s17, 16
          %s158 = smul.addr %s157, 8
          %s159 = scalar_lea.hbm %s0, %s158
          %s160 = sshll.u32 %s159, 4
          %s161 = int_to_ptr.hbm [resolvable:$true] %s160
          %s162 = sshll.u32 %s154, 4
          %s163 = int_to_ptr.vmem [resolvable:$true] %s162
          %168 = dma.hbm_to_vmem [thread:$0]  %s161, 2048, %s163, %s151, 128, 128, 8
        $region28: #{tpu_custom_call.1} parent=23 // pred_fallthru
          _
      $region24: #{tpu_custom_call.1} parent=5 // pred_fallthru
        _
      %p169 = scmp.le.s32.totalorder 1, %s17
      %p170 = scmp.lt.s32.totalorder %s17, 3
      %p171 = pnand %p169, %p170
      %p172 = pneg %p171
      // Predicated region
      $region29: #{tpu_custom_call.1} parent=5 // pred_check
        _
      $region30: #{tpu_custom_call.1} parent=5 // pred_check_branch
        %174 = sbr.rel (%p171) target = $region32
      $region31: #{tpu_custom_call.1} parent=5 // pred_region
        %s175 = ssub.s32 %s17, 1
        %s176 = sand.u32 %s30, 1
        %s177 = scalar_lea.sflag [#allocation4], %s176
        %s178 = sand.u32 %s30, 1
        %s179 = smul.addr %s178, 128
        %s180 = scalar_lea.vmem [#allocation3], %s179
        // Predicated region
        $region33: #{tpu_custom_call.1} parent=31 // pred_check
          %p181 = pneg %p43
        $region34: #{tpu_custom_call.1} parent=31 // pred_check_branch
          %183 = sbr.rel (%p181) target = $region36
        $region35: #{tpu_custom_call.1} parent=31 // pred_region
          %185 = dma.done %s177, 2048
        $region36: #{tpu_custom_call.1} parent=31 // pred_fallthru
          _
        // Predicated region
        $region37: #{tpu_custom_call.1} parent=31 // pred_check
          %p186 = pneg %p64
        $region38: #{tpu_custom_call.1} parent=31 // pred_check_branch
          %188 = sbr.rel (%p186) target = $region40
        $region39: #{tpu_custom_call.1} parent=31 // pred_region
          %190 = dma.done [#allocation7], 256
        $region40: #{tpu_custom_call.1} parent=31 // pred_fallthru
          _
        %s191 = sand.u32 %s30, 1
        %s192 = scalar_lea.sflag [#allocation4], %s191
        %s193 = sand.u32 %s30, 1
        %s194 = smul.addr %s193, 128
        %s195 = scalar_lea.vmem [#allocation3], %s194
        %p196 = pneg %p43
        %p197 = pneg %p40
        %p198 = pneg %p64
        %p199 = pneg %p61
        %p200 = pneg %p85
        %p201 = pneg %p82
        %p202 = pneg %p111
        %p203 = pneg %p108
        %s204 = sand.u32 %s98, 1
        %s205 = scalar_lea.sflag [#allocation5], %s204
        %s206 = sand.u32 %s98, 1
        %s207 = smul.addr %s206, 128
        %s208 = scalar_lea.vmem [#allocation8], %s207
        %v209 = vld [vmem:[%s180] sm:$0xff]
        %v210 = vld [vmem:[%s180 + $0x8] sm:$0xff]
        %v211 = vld [vmem:[%s180 + $0x10] sm:$0xff]
        %v212 = vld [vmem:[%s180 + $0x18] sm:$0xff]
        %v213 = vld [vmem:[%s180 + $0x20] sm:$0xff]
        %v214 = vld [vmem:[%s180 + $0x28] sm:$0xff]
        %v215 = vld [vmem:[%s180 + $0x30] sm:$0xff]
        %v216 = vld [vmem:[%s180 + $0x38] sm:$0xff]
        %v217 = vld [vmem:[%s180 + $0x40] sm:$0xff]
        %v218 = vld [vmem:[%s180 + $0x48] sm:$0xff]
        %v219 = vld [vmem:[%s180 + $0x50] sm:$0xff]
        %v220 = vld [vmem:[%s180 + $0x58] sm:$0xff]
        %v221 = vld [vmem:[%s180 + $0x60] sm:$0xff]
        %v222 = vld [vmem:[%s180 + $0x68] sm:$0xff]
        %v223 = vld [vmem:[%s180 + $0x70] sm:$0xff]
        %v224 = vld [vmem:[%s180 + $0x78] sm:$0xff]
        %v225 = vld [vmem:[#allocation6] sm:$0xff]
        %v226 = vld [vmem:[#allocation6 + $0x8] sm:$0xff]
        %s227 = sld [smem:[#allocation2]]
        %v228 = vrot.slane %v209, 4
        %v229 = vadd.f32 %v209, %v228
        %v230 = vrot.slane %v229, 2
        %v231 = vadd.f32 %v229, %v230
        %v232 = vrot.slane %v231, 1
        %v233 = vadd.f32 %v231, %v232
        %v234 = vrot.slane %v210, 4
        %v235 = vadd.f32 %v210, %v234
        %v236 = vrot.slane %v235, 2
        %v237 = vadd.f32 %v235, %v236
        %v238 = vrot.slane %v237, 1
        %v239 = vadd.f32 %v237, %v238
        %v240 = vrot.slane %v211, 4
        %v241 = vadd.f32 %v211, %v240
        %v242 = vrot.slane %v241, 2
        %v243 = vadd.f32 %v241, %v242
        %v244 = vrot.slane %v243, 1
        %v245 = vadd.f32 %v243, %v244
        %v246 = vrot.slane %v212, 4
        %v247 = vadd.f32 %v212, %v246
        %v248 = vrot.slane %v247, 2
        %v249 = vadd.f32 %v247, %v248
        %v250 = vrot.slane %v249, 1
        %v251 = vadd.f32 %v249, %v250
        %v252 = vrot.slane %v213, 4
        %v253 = vadd.f32 %v213, %v252
        %v254 = vrot.slane %v253, 2
        %v255 = vadd.f32 %v253, %v254
        %v256 = vrot.slane %v255, 1
        %v257 = vadd.f32 %v255, %v256
        %v258 = vrot.slane %v214, 4
        %v259 = vadd.f32 %v214, %v258
        %v260 = vrot.slane %v259, 2
        %v261 = vadd.f32 %v259, %v260
        %v262 = vrot.slane %v261, 1
        %v263 = vadd.f32 %v261, %v262
        %v264 = vrot.slane %v215, 4
        %v265 = vadd.f32 %v215, %v264
        %v266 = vrot.slane %v265, 2
        %v267 = vadd.f32 %v265, %v266
        %v268 = vrot.slane %v267, 1
        %v269 = vadd.f32 %v267, %v268
        %v270 = vrot.slane %v216, 4
        %v271 = vadd.f32 %v216, %v270
        %v272 = vrot.slane %v271, 2
        %v273 = vadd.f32 %v271, %v272
        %v274 = vrot.slane %v273, 1
        %v275 = vadd.f32 %v273, %v274
        %v276 = vrot.slane %v217, 4
        %v277 = vadd.f32 %v217, %v276
        %v278 = vrot.slane %v277, 2
        %v279 = vadd.f32 %v277, %v278
        %v280 = vrot.slane %v279, 1
        %v281 = vadd.f32 %v279, %v280
        %v282 = vrot.slane %v218, 4
        %v283 = vadd.f32 %v218, %v282
        %v284 = vrot.slane %v283, 2
        %v285 = vadd.f32 %v283, %v284
        %v286 = vrot.slane %v285, 1
        %v287 = vadd.f32 %v285, %v286
        %v288 = vrot.slane %v219, 4
        %v289 = vadd.f32 %v219, %v288
        %v290 = vrot.slane %v289, 2
        %v291 = vadd.f32 %v289, %v290
        %v292 = vrot.slane %v291, 1
        %v293 = vadd.f32 %v291, %v292
        %v294 = vrot.slane %v220, 4
        %v295 = vadd.f32 %v220, %v294
        %v296 = vrot.slane %v295, 2
        %v297 = vadd.f32 %v295, %v296
        %v298 = vrot.slane %v297, 1
        %v299 = vadd.f32 %v297, %v298
        %v300 = vrot.slane %v221, 4
        %v301 = vadd.f32 %v221, %v300
        %v302 = vrot.slane %v301, 2
        %v303 = vadd.f32 %v301, %v302
        %v304 = vrot.slane %v303, 1
        %v305 = vadd.f32 %v303, %v304
        %v306 = vrot.slane %v222, 4
        %v307 = vadd.f32 %v222, %v306
        %v308 = vrot.slane %v307, 2
        %v309 = vadd.f32 %v307, %v308
        %v310 = vrot.slane %v309, 1
        %v311 = vadd.f32 %v309, %v310
        %v312 = vrot.slane %v223, 4
        %v313 = vadd.f32 %v223, %v312
        %v314 = vrot.slane %v313, 2
        %v315 = vadd.f32 %v313, %v314
        %v316 = vrot.slane %v315, 1
        %v317 = vadd.f32 %v315, %v316
        %v318 = vrot.slane %v224, 4
        %v319 = vadd.f32 %v224, %v318
        %v320 = vrot.slane %v319, 2
        %v321 = vadd.f32 %v319, %v320
        %v322 = vrot.slane %v321, 1
        %v323 = vadd.f32 %v321, %v322
        %v324 = vrcp.pop 8.0
        %v325 = vmul.f32 8.0, %v324
        %v326 = vsub.f32 1.0, %v325
        %v327 = vmul.f32 %v324, %v326
        %v328 = vadd.f32 %v324, %v327
        %vm329 = vweird.f32 %v324
        %v330 = vsel %vm329, %v324, %v328
        %v331 = vmul.f32 %v233, %v330
        %v332 = vmul.f32 %v239, %v330
        %v333 = vmul.f32 %v245, %v330
        %v334 = vmul.f32 %v251, %v330
        %v335 = vmul.f32 %v257, %v330
        %v336 = vmul.f32 %v263, %v330
        %v337 = vmul.f32 %v269, %v330
        %v338 = vmul.f32 %v275, %v330
        %v339 = vmul.f32 %v281, %v330
        %v340 = vmul.f32 %v287, %v330
        %v341 = vmul.f32 %v293, %v330
        %v342 = vmul.f32 %v299, %v330
        %v343 = vmul.f32 %v305, %v330
        %v344 = vmul.f32 %v311, %v330
        %v345 = vmul.f32 %v317, %v330
        %v346 = vmul.f32 %v323, %v330
        %v347 = vstv %s227
        %vm364 = vcmask 1041409
        %v365 = vsel %vm364, %v332, %v331
        %vm366 = vcmask 1042434
        %v367 = vsel %vm366, %v333, %v365
        %vm368 = vcmask 1043459
        %v369 = vsel %vm368, %v334, %v367
        %vm370 = vcmask 1044484
        %v371 = vsel %vm370, %v335, %v369
        %vm372 = vcmask 1045509
        %v373 = vsel %vm372, %v336, %v371
        %vm374 = vcmask 1046534
        %v375 = vsel %vm374, %v337, %v373
        %vm376 = vcmask 1047559
        %v377 = vsel %vm376, %v338, %v375
        %v378 = vsel %vm364, %v340, %v339
        %v379 = vsel %vm366, %v341, %v378
        %v380 = vsel %vm368, %v342, %v379
        %v381 = vsel %vm370, %v343, %v380
        %v382 = vsel %vm372, %v344, %v381
        %v383 = vsel %vm374, %v345, %v382
        %v384 = vsel %vm376, %v346, %v383
        %vm387 = vcmask 130048
        %v389 = vsel %vm387, %v225, 0
        %v392 = vsel %vm387, %v226, 0
        %394 = vmatpush.msra.mxu0 0.0
        %395 = vmatpush.msra.mxu0 0.0
        %396 = vmatpush.msra.mxu0 0.0
        %397 = vmatpush.msra.mxu0 0.0
        %398 = vmatpush.msra.mxu0 0.0
        %399 = vmatpush.msra.mxu0 0.0
        %400 = vmatpush.msra.mxu0 0.0
        %401 = vmatpush.msra.mxu0 0.0
        %402 = vmatpush.msra.mxu0 0.0
        %403 = vmatpush.msra.mxu0 0.0
        %404 = vmatpush.msra.mxu0 0.0
        %405 = vmatpush.msra.mxu0 0.0
        %406 = vmatpush.msra.mxu0 0.0
        %407 = vmatpush.msra.mxu0 0.0
        %408 = vmatpush.msra.mxu0 %v384
        %409 = vmatpush.msra.mxu0 %v377
        %410 = vmatmul.f32.gmra.mxu0 %v389
        %v411 = vpop.f32.mrf.mxu0
        %v412 = vadd.f32 %v347, %v411
        %413 = vmatmul.f32.gmra.mxu0 %v392
        %v414 = vpop.f32.mrf.mxu0
        %v415 = vadd.f32 %v347, %v414
        %416 = vdwg.mxu0
        %v417 = vmax.f32 %v412, %v415
        %v418 = vrot.slane %v417, 4
        %v419 = vmax.f32 %v417, %v418
        %v420 = vrot.slane %v419, 2
        %v421 = vmax.f32 %v419, %v420
        %v422 = vrot.slane %v421, 1
        %v423 = vmax.f32 %v421, %v422
        %v424 = vsub.f32 %v412, %v423
        %v425 = vsub.f32 %v415, %v423
        %v426 = vmul.f32 %v424, 1.442695
        %v427 = vpow.pop %v426
        %v428 = vmul.f32 %v425, 1.442695
        %v429 = vpow.pop %v428
        %v430 = vadd.f32 %v427, %v429
        %v431 = vrot.slane %v430, 4
        %v432 = vadd.f32 %v430, %v431
        %v433 = vrot.slane %v432, 2
        %v434 = vadd.f32 %v432, %v433
        %v435 = vrot.slane %v434, 1
        %v436 = vadd.f32 %v434, %v435
        %v437 = vrcp.pop %v436
        %v438 = vmul.f32 %v436, %v437
        %v439 = vsub.f32 1.0, %v438
        %v440 = vmul.f32 %v437, %v439
        %v441 = vadd.f32 %v437, %v440
        %vm442 = vweird.f32 %v436
        %vm443 = vweird.f32 %v437
        %vm444 = vmor %vm442, %vm443
        %v445 = vsel %vm444, %v437, %v441
        %v446 = vand.u32 2147483647, %v436
        %vm447 = vcmp.eq.f32.partialorder %v446, 8.507059e+37
        %v448 = vand.u32 %v436, 2147483648
        %v449 = vor.u32 1.1754944e-38, %v448
        %v450 = vsel %vm447, %v449, %v445
        %v451 = vmul.f32 %v427, %v450
        %v452 = vmul.f32 %v429, %v450
        %v453 = vmul.f32 %v451, 16.0
        %v454 = vmul.f32 %v452, 16.0
        %v457 = vrot.slane %v453, 1
        %v458 = vrot.slane %v453, 2
        %v459 = vrot.slane %v453, 3
        %v460 = vrot.slane %v453, 4
        %v461 = vrot.slane %v453, 5
        %v462 = vrot.slane %v453, 6
        %v463 = vrot.slane %v453, 7
        %v464 = vrot.slane %v454, 1
        %v465 = vrot.slane %v454, 2
        %v466 = vrot.slane %v454, 3
        %v467 = vrot.slane %v454, 4
        %v468 = vrot.slane %v454, 5
        %v469 = vrot.slane %v454, 6
        %v470 = vrot.slane %v454, 7
        %v471 = vperm.slane %v453, 0
        %v472 = vperm.slane %v457, 0
        %v473 = vperm.slane %v458, 0
        %v474 = vperm.slane %v459, 0
        %v475 = vperm.slane %v460, 0
        %v476 = vperm.slane %v461, 0
        %v477 = vperm.slane %v462, 0
        %v478 = vperm.slane %v463, 0
        %v479 = vperm.slane %v454, 0
        %v480 = vperm.slane %v464, 0
        %v481 = vperm.slane %v465, 0
        %v482 = vperm.slane %v466, 0
        %v483 = vperm.slane %v467, 0
        %v484 = vperm.slane %v468, 0
        %v485 = vperm.slane %v469, 0
        %v486 = vperm.slane %v470, 0
        %v503 = vmul.f32 %v471, %v209
        %v504 = vmul.f32 %v472, %v210
        %v505 = vmul.f32 %v473, %v211
        %v506 = vmul.f32 %v474, %v212
        %v507 = vmul.f32 %v475, %v213
        %v508 = vmul.f32 %v476, %v214
        %v509 = vmul.f32 %v477, %v215
        %v510 = vmul.f32 %v478, %v216
        %v511 = vmul.f32 %v479, %v217
        %v512 = vmul.f32 %v480, %v218
        %v513 = vmul.f32 %v481, %v219
        %v514 = vmul.f32 %v482, %v220
        %v515 = vmul.f32 %v483, %v221
        %v516 = vmul.f32 %v484, %v222
        %v517 = vmul.f32 %v485, %v223
        %v518 = vmul.f32 %v486, %v224
        %519 = vst [vmem:[%s208] sm:$0xff] %v503
        %520 = vst [vmem:[%s208 + $0x8] sm:$0xff] %v504
        %521 = vst [vmem:[%s208 + $0x10] sm:$0xff] %v505
        %522 = vst [vmem:[%s208 + $0x18] sm:$0xff] %v506
        %523 = vst [vmem:[%s208 + $0x20] sm:$0xff] %v507
        %524 = vst [vmem:[%s208 + $0x28] sm:$0xff] %v508
        %525 = vst [vmem:[%s208 + $0x30] sm:$0xff] %v509
        %526 = vst [vmem:[%s208 + $0x38] sm:$0xff] %v510
        %527 = vst [vmem:[%s208 + $0x40] sm:$0xff] %v511
        %528 = vst [vmem:[%s208 + $0x48] sm:$0xff] %v512
        %529 = vst [vmem:[%s208 + $0x50] sm:$0xff] %v513
        %530 = vst [vmem:[%s208 + $0x58] sm:$0xff] %v514
        %531 = vst [vmem:[%s208 + $0x60] sm:$0xff] %v515
        %532 = vst [vmem:[%s208 + $0x68] sm:$0xff] %v516
        %533 = vst [vmem:[%s208 + $0x70] sm:$0xff] %v517
        %534 = vst [vmem:[%s208 + $0x78] sm:$0xff] %v518
        %s535 = sand.u32 %s98, 1
        %s536 = scalar_lea.sflag [#allocation5], %s535
        %s537 = sand.u32 %s98, 1
        %s538 = smul.addr %s537, 128
        %s539 = scalar_lea.vmem [#allocation8], %s538
        // Predicated region
        $region41: #{tpu_custom_call.1} parent=31 // pred_check
          %p540 = pneg %p108
        $region42: #{tpu_custom_call.1} parent=31 // pred_check_branch
          %542 = sbr.rel (%p540) target = $region44
        $region43: #{tpu_custom_call.1} parent=31 // pred_region
          %544 = vsyncadd %s536, 0
          %s545 = smul.addr %s22, 16
          %s546 = smul.addr %s545, 8
          %s547 = scalar_lea.hbm %s3, %s546
          %s548 = sshll.u32 %s539, 4
          %s549 = int_to_ptr.vmem [resolvable:$true] %s548
          %s550 = sshll.u32 %s547, 4
          %s551 = int_to_ptr.hbm [resolvable:$true] %s550
          %556 = dma.vmem_to_hbm [thread:$0]  %s549, 2048, %s551, %s536, 128, 128, 8
        $region44: #{tpu_custom_call.1} parent=31 // pred_fallthru
          _
      $region32: #{tpu_custom_call.1} parent=5 // pred_fallthru
        _
      %p557 = scmp.le.s32.totalorder 2, %s17
      // Predicated region
      $region45: #{tpu_custom_call.1} parent=5 // pred_check
        %p558 = pneg %p557
      $region46: #{tpu_custom_call.1} parent=5 // pred_check_branch
        %560 = sbr.rel (%p558) target = $region48
      $region47: #{tpu_custom_call.1} parent=5 // pred_region
        %s561 = ssub.s32 %s17, 2
        // Predicated region
        $region49: #{tpu_custom_call.1} parent=47 // pred_check
          %p562 = pneg %p114
        $region50: #{tpu_custom_call.1} parent=47 // pred_check_branch
          %564 = sbr.rel (%p562) target = $region52
        $region51: #{tpu_custom_call.1} parent=47 // pred_region
          %s565 = sand.u32 %s99, 1
          %s566 = scalar_lea.sflag [#allocation5], %s565
          %s567 = sand.u32 %s99, 1
          %s568 = smul.addr %s567, 128
          %s569 = scalar_lea.vmem [#allocation8], %s568
          %571 = dma.done %s566, 2048
        $region52: #{tpu_custom_call.1} parent=47 // pred_fallthru
          _
      $region48: #{tpu_custom_call.1} parent=5 // pred_fallthru
        _
    $region6: #{tpu_custom_call.1} parent=1 // loop_footer
      %s21 = sadd.s32 1, %s17
    $region7: #{tpu_custom_call.1} parent=1 // loop_footer_branch
      %16 = sbr.rel target = $region3
    $region8: #{tpu_custom_call.1} parent=1 // loop_exit
      _
    %572 = vsyncpa [#allocation4], 1
    %s573 = scalar_lea.sflag [#allocation4], 1
    %574 = vsyncpa %s573, 1
    %575 = vsyncpa [#allocation7], 1
    %576 = vsyncpa [#allocation5], 1
    %s577 = scalar_lea.sflag [#allocation5], 1
    %578 = vsyncpa %s577, 1

</llo_original>
